<compile_context>
chip_gen: v6e
topology: v6e:2x2x1
jax: 0.10.0
libtpu: 0.0.40
codegen_flags: <defaults>
</compile_context>

<pallas_src>
import jax
import jax.numpy as jnp
import numpy as np
from jax.experimental import pallas as pl
from jax.experimental.pallas import tpu as pltpu


def _rise_kernel(mask_ref, u_ref, b_ref, out_ref):
    """One grid step over a (tile, HW) block of masks.

    score = masks @ u + b_cls        (tile, 1), f32 accumulation on the MXU
    out  += score^T @ masks          (1, HW)  rank-1 update, f32 accumulator
    """
    # Zero the per-core accumulator at the start of its reduction loop.
    @pl.when(pl.program_id(1) == 0)
    def _():
        out_ref[...] = jnp.zeros_like(out_ref)

    m = mask_ref[...]                                           # (tile, HW) bf16
    score = jnp.dot(m, u_ref[...],
                    preferred_element_type=jnp.float32)         # (tile, 1) f32
    score = score + b_ref[...]                                  # + b[cls]

    upd = jnp.dot(score.astype(m.dtype).T, m,
                  preferred_element_type=jnp.float32)           # (1, HW) f32
    out_ref[...] += upd[None]                                   # (1, 1, HW)


def rise_forward(x, masks, W, b, *, batch_size, p1, class_idx=None):
    """x: (1, C, H, W) f32; masks: (N, 1, H, W) f32; W: (C*H*W, K); b: (K,)."""
    _, C, H, W_ = x.shape
    N = masks.shape[0]
    HW = H * W_
    assert N % batch_size == 0  # mirrors the PyTorch module contract

    x_flat = x.reshape(C, HW)
    b_row = b.reshape(1, -1)

    # Glue: run the "model" once on x to pick the class (same as PyTorch path).
    if class_idx is None:
        logit_x = x.reshape(1, C * HW) @ W + b_row                # (1, K)
        class_idx_arr = jnp.argmax(logit_x, axis=1).astype(jnp.int32)
    else:
        class_idx_arr = jnp.asarray([class_idx], dtype=jnp.int32)
    cls = class_idx_arr[0]

    # Algebraic hoist: per-pixel weight for the selected class.
    w_cls = jax.lax.dynamic_slice_in_dim(W, cls, 1, axis=1)       # (C*HW, 1)
    u = jnp.sum(x_flat * w_cls.reshape(C, HW), axis=0)            # (HW,)
    b_cls = jax.lax.dynamic_slice_in_dim(b, cls, 1, axis=0)       # (1,)

    # bf16 MXU/DMA inputs; accumulation stays f32 inside the kernel.
    masks_bf = masks.reshape(N, HW).astype(jnp.bfloat16)          # (N, HW)
    u_bf = u.reshape(HW, 1).astype(jnp.bfloat16)                  # (HW, 1)
    b_cls2 = b_cls.reshape(1, 1).astype(jnp.float32)              # (1, 1)

    # Tiling: big mask tiles (multiple of 16 rows for bf16) + a 2-way parallel
    # split of the mask set (one partial saliency per v7x TensorCore).
    num_parallel = 2 if N % 32 == 0 else 1
    n_per_core = N // num_parallel
    mask_tile = next((t for t in (512, 256, 128, 64, 32, 16)
                      if n_per_core % t == 0), None)
    if mask_tile is None:            # fall back to one full-extent block
        num_parallel, n_per_core, mask_tile = 1, N, N
    inner = n_per_core // mask_tile

    partial = pl.pallas_call(
        _rise_kernel,
        out_shape=jax.ShapeDtypeStruct((num_parallel, 1, HW), jnp.float32),
        grid=(num_parallel, inner),
        in_specs=[
            # masks: each core streams its own contiguous chunk of mask rows.
            pl.BlockSpec((mask_tile, HW), lambda p, i: (p * inner + i, 0)),
            # u and b[cls] are grid-invariant and tiny.
            pl.BlockSpec((HW, 1), lambda p, i: (0, 0)),
            pl.BlockSpec((1, 1), lambda p, i: (0, 0)),
        ],
        out_specs=pl.BlockSpec((1, 1, HW), lambda p, i: (p, 0, 0)),
        compiler_params=pltpu.CompilerParams(
            dimension_semantics=("parallel", "arbitrary"),
            vmem_limit_bytes=48 * 1024 * 1024),
    )(masks_bf, u_bf, b_cls2)

    saliency = partial.sum(axis=0).reshape(1, 1, H, W_) * (1.0 / (N * p1))
    return saliency, class_idx_arr


def generate_rise_masks(key, N, input_size, s, p1):
    """Deterministic JAX version of RISE.generate_masks (bilinear upsample + crop)."""
    H, W = input_size
    cell_h = int(np.ceil(H / s))
    cell_w = int(np.ceil(W / s))
    up_h, up_w = (s + 1) * cell_h, (s + 1) * cell_w
    k1, k2, k3 = jax.random.split(key, 3)
    grid = (jax.random.uniform(k1, (N, s, s)) < p1).astype(jnp.float32)
    up = jax.image.resize(grid, (N, up_h, up_w), method="bilinear")
    xs = jax.random.randint(k2, (N,), 0, cell_h)
    ys = jax.random.randint(k3, (N,), 0, cell_w)

    def crop(img, ox, oy):
        return jax.lax.dynamic_slice(img, (ox, oy), (H, W))

    masks = jax.vmap(crop)(up, xs, ys)                   # (N, H, W)
    return masks.reshape(N, 1, H, W)


def rise_reference(x, masks, W, b, *, batch_size, p1, class_idx):
    """Pure-JAX f32 reference mirroring the PyTorch loop (full model each step)."""
    _, C, H, W_ = x.shape
    N = masks.shape[0]
    saliency = jnp.zeros((1, 1, H, W_), jnp.float32)
    for i in range(0, N, batch_size):
        mask = masks[i:i + batch_size]                   # (B, 1, H, W)
        masked = mask * x                                # (B, C, H, W)
        logit = masked.reshape(mask.shape[0], -1) @ W + b[None, :]
        score = logit[:, class_idx][:, :, None, None]    # (B, 1, 1, 1)
        saliency = saliency + (score * mask).sum(axis=0, keepdims=True)
    return saliency / N / p1


if __name__ == "__main__":
    # Small, deterministic problem (enough masks to exercise 128-row tiles
    # and the 2-way parallel split).
    N, batch_size = 256, 128
    C, H, W_ = 4, 16, 16
    K = 16              # num classes of the synthetic linear "model"
    s, p1 = 7, 0.1

    key = jax.random.PRNGKey(0)
    kx, km, kw, kb = jax.random.split(key, 4)

    x = jax.random.normal(kx, (1, C, H, W_), dtype=jnp.float32)
    masks = generate_rise_masks(km, N, (H, W_), s, p1)
    Wlin = jax.random.normal(kw, (C * H * W_, K), dtype=jnp.float32) * 0.02
    blin = jax.random.normal(kb, (K,), dtype=jnp.float32) * 0.02

    sal, cls = rise_forward(x, masks, Wlin, blin, batch_size=batch_size, p1=p1)
    sal = jax.block_until_ready(sal)

    # The kernel streams masks in bf16; feed the same (bf16-rounded) masks to
    # the exact-arithmetic f32 reference so the comparison isolates kernel math.
    masks_q = masks.astype(jnp.bfloat16).astype(jnp.float32)
    ref = rise_reference(x, masks_q, Wlin, blin,
                         batch_size=batch_size, p1=p1, class_idx=cls)
    np.testing.assert_allclose(np.asarray(sal), np.asarray(ref),
                               rtol=2e-2, atol=2e-4)
    print("KERNEL_OK")
</pallas_src>

<mosaic_0001>
module attributes {stable_mosaic.version = 11 : i64} {
  func.func @_rise_kernel(%arg0: i32, %arg1: i32, %arg2: memref<128x256xbf16, #tpu.memory_space<vmem>>, %arg3: memref<256x1xbf16, #tpu.memory_space<vmem>>, %arg4: memref<1x1xf32, #tpu.memory_space<vmem>>, %arg5: memref<1x1x256xf32, #tpu.memory_space<vmem>>) attributes {dimension_semantics = [#tpu.dimension_semantics<parallel>, #tpu.dimension_semantics<arbitrary>], iteration_bounds = array<i64: 2, 1>, scalar_prefetch = 0 : i64, scratch_operands = 0 : i64, tpu.core_type = #tpu.core_type<tc>, window_params = [{transform_indices = @transform_0, window_bounds = array<i64: 128, 256>}, {pipeline_mode = #tpu.pipeline_mode<synchronous>, transform_indices = @transform_1, window_bounds = array<i64: 256, 1>}, {pipeline_mode = #tpu.pipeline_mode<synchronous>, transform_indices = @transform_2, window_bounds = array<i64: 1, 1>}, {transform_indices = @transform_3, window_bounds = array<i64: 1, 1, 256>}]} {
    %c0_i32 = arith.constant 0 : i32
    %0 = arith.cmpi eq, %arg1, %c0_i32 : i32
    %1 = arith.extui %0 : i1 to i32
    %c0_i32_0 = arith.constant 0 : i32
    %2 = arith.cmpi ne, %1, %c0_i32_0 : i32
    scf.if %2 {
      %cst_13 = arith.constant 0.000000e+00 : f32
      %16 = vector.broadcast %cst_13 : f32 to vector<1x1x256xf32>
      %c0_14 = arith.constant 0 : index
      %c0_15 = arith.constant 0 : index
      %c0_16 = arith.constant 0 : index
      %17 = vector.load %arg5[%c0_14, %c0_15, %c0_16] : memref<1x1x256xf32, #tpu.memory_space<vmem>>, vector<1x1x256xf32>
      tpu.vector_store %arg5[%c0_14, %c0_15, %c0_16], %16 {strides = array<i32>} : memref<1x1x256xf32, #tpu.memory_space<vmem>>, vector<1x1x256xf32>,
    } else {
    }
    %c0 = arith.constant 0 : index
    %c0_1 = arith.constant 0 : index
    %3 = vector.load %arg2[%c0, %c0_1] : memref<128x256xbf16, #tpu.memory_space<vmem>>, vector<128x256xbf16>
    %c0_2 = arith.constant 0 : index
    %c0_3 = arith.constant 0 : index
    %4 = vector.load %arg3[%c0_2, %c0_3] : memref<256x1xbf16, #tpu.memory_space<vmem>>, vector<256x1xbf16>
    %cst = arith.constant dense<0.000000e+00> : vector<128x1xf32>
    %5 = tpu.matmul %3, %4, %cst {dimension_numbers = #tpu.dot_dimension_numbers<[1], [0], [0], [1], [0, 0, 1, 1], [], []>} : vector<128x256xbf16>, vector<256x1xbf16>, vector<128x1xf32> -> vector<128x1xf32>
    %c0_4 = arith.constant 0 : index
    %c0_5 = arith.constant 0 : index
    %6 = vector.load %arg4[%c0_4, %c0_5] : memref<1x1xf32, #tpu.memory_space<vmem>>, vector<1x1xf32>
    %7 = vector.broadcast %6 : vector<1x1xf32> to vector<128x1xf32>
    %8 = arith.addf %5, %7 : vector<128x1xf32>
    %9 = arith.truncf %8 : vector<128x1xf32> to vector<128x1xbf16>
    %10 = tpu.transpose %9, [1, 0] : vector<128x1xbf16> -> vector<1x128xbf16>
    %cst_6 = arith.constant dense<0.000000e+00> : vector<1x256xf32>
    %11 = tpu.matmul %10, %3, %cst_6 {dimension_numbers = #tpu.dot_dimension_numbers<[1], [0], [0], [1], [0, 0, 1, 1], [], []>} : vector<1x128xbf16>, vector<128x256xbf16>, vector<1x256xf32> -> vector<1x256xf32>
    %c0_7 = arith.constant 0 : index
    %c0_8 = arith.constant 0 : index
    %c0_9 = arith.constant 0 : index
    %12 = vector.load %arg5[%c0_7, %c0_8, %c0_9] : memref<1x1x256xf32, #tpu.memory_space<vmem>>, vector<1x1x256xf32>
    %13 = vector.shape_cast %11 : vector<1x256xf32> to vector<1x1x256xf32>
    %14 = arith.addf %12, %13 : vector<1x1x256xf32>
    %c0_10 = arith.constant 0 : index
    %c0_11 = arith.constant 0 : index
    %c0_12 = arith.constant 0 : index
    %15 = vector.load %arg5[%c0_10, %c0_11, %c0_12] : memref<1x1x256xf32, #tpu.memory_space<vmem>>, vector<1x1x256xf32>
    tpu.vector_store %arg5[%c0_10, %c0_11, %c0_12], %14 {strides = array<i32>} : memref<1x1x256xf32, #tpu.memory_space<vmem>>, vector<1x1x256xf32>,
    return
  }
  func.func @transform_0(%arg0: i32, %arg1: i32) -> (i32, i32) {
    %c1_i32 = arith.constant 1 : i32
    %0 = arith.muli %arg0, %c1_i32 : i32
    %1 = arith.addi %0, %arg1 : i32
    %c0_i32 = arith.constant 0 : i32
    %c0_i32_0 = arith.constant 0 : i32
    return %1, %c0_i32 : i32, i32
  }
  func.func @transform_1(%arg0: i32, %arg1: i32) -> (i32, i32) {
    %c0_i32 = arith.constant 0 : i32
    %c0_i32_0 = arith.constant 0 : i32
    %c0_i32_1 = arith.constant 0 : i32
    return %c0_i32, %c0_i32_0 : i32, i32
  }
  func.func @transform_2(%arg0: i32, %arg1: i32) -> (i32, i32) {
    %c0_i32 = arith.constant 0 : i32
    %c0_i32_0 = arith.constant 0 : i32
    %c0_i32_1 = arith.constant 0 : i32
    return %c0_i32, %c0_i32_0 : i32, i32
  }
  func.func @transform_3(%arg0: i32, %arg1: i32) -> (i32, i32, i32) {
    %c0_i32 = arith.constant 0 : i32
    %c0_i32_0 = arith.constant 0 : i32
    %c0_i32_1 = arith.constant 0 : i32
    return %arg0, %c0_i32, %c0_i32_0 : i32, i32, i32
  }
}

</mosaic_0001>

<llo_original>
// kernel: tpu_custom_call.1
$region0: #{tpu_custom_call.1}
  #allocation0 [shape = 'u32[]', space=smem, size = 0x4, offset = 0x4, fixed_abs, tag = 'smem constant byte address 0x4 - core index']
  #allocation1 [shape = 'u32[144,128]{1,0:T(1,128)}', space=vmem, size = 0x12000, scoped, tag = 'internal scratch']
  #allocation2 [shape = 'f32[1,1]{1,0:T(1,128)S(1)}', space=vmem, size = 0x200, scoped, tag = 'scoped memory for tpu_custom_call.1']
  %s0 = inlined_call_operand.hbm [shape: bf16[256,256], index: 0, kind: input, shape index: {}]
  %s1 = inlined_call_operand.vmem [shape: bf16[256,1], index: 1, kind: input, shape index: {}]
  %s2 = inlined_call_operand.<no memory space> [shape: f32[1,1], index: 2, kind: input, shape index: {}]
  %s3 = inlined_call_operand.hbm [shape: f32[2,1,256], index: 3, kind: output, shape index: {}]
  %s4 = sld [smem:[#allocation0]]
  $region53: #{tpu_custom_call.1} parent=0
    _
  %s6 = ssub.s32 1, %s4
  %s7 = scalar_select 0, %s6, %s4
  %v8 = vstv %s2
  %9 = vst [vmem:[#allocation2] sm:$0x1] %v8
  $region1: #{tpu_custom_call.1} parent=0
    #allocation3 [shape = 'u8[131072]{0}', space=vmem, size = 0x20000, scoped, tag = 'input window, operand 0']
    #allocation4 [shape = 's32[2]{0}', space=sflag, size = 0x8, scoped, tag = 'scoped memory for tpu_custom_call.1']
    #allocation5 [shape = 's32[2]{0}', space=sflag, size = 0x8, scoped, tag = 'scoped memory for tpu_custom_call.1']
    #allocation6 [shape = 'u8[2048]{0}', space=vmem, size = 0x800, scoped, tag = 'output window, operand 0']
    %10 = vsyncpa [#allocation4], 0
    %s11 = scalar_lea.sflag [#allocation4], 1
    %12 = vsyncpa %s11, 0
    %13 = vsyncpa [#allocation5], 0
    %s14 = scalar_lea.sflag [#allocation5], 1
    %15 = vsyncpa %s14, 0
    loop: start=0, step=1, limit=4
    $region2: #{tpu_custom_call.1} parent=1 // loop_pre_header
      _
    $region3: #{tpu_custom_call.1} parent=1 // loop_header
      %s17 = sphi 0, %s21
      %p18 = scmp.ge.s32.totalorder %s17, 4
      %s24 = sphi 0, %s36
      %s25 = sphi 0, %s32
      %s26 = sphi 0, %s24
      %s27 = sphi 0, %s25
      %s28 = sphi 0, %s26
      %s29 = sphi 0, %s27
      %s41 = sphi 0, %s43
      %s44 = sphi 0, %s41
      %s45 = sphi 0, %s44
      %s61 = sphi 0, %s45
      %s65 = sphi 0, %s65
      %s67 = sphi 0, %s65
      %s68 = sphi 0, %s67
      %s82 = sphi 0, %s68
      %s86 = sphi 0, %s86
      %s88 = sphi 0, %s86
      %s89 = sphi 0, %s88
      %s103 = sphi 0, %s89
      %s109 = sphi 0, %s111
      %s112 = sphi 0, %s109
      %s113 = sphi 0, %s112
      %s129 = sphi 0, %s113
    $region4: #{tpu_custom_call.1} parent=1 // loop_header_branch
      %20 = sbr.rel (%p18) target = $region8
    $region5: #{tpu_custom_call.1} parent=1 // loop_body
      %s22 = ssub.s32 %s17, 1
      %s23 = ssub.s32 %s17, 2
      %s30 = sadd.s32 1, %s25
      %p31 = scmp.ge.s32.totalorder %s30, 1
      %s32 = scalar_select %p31, 0, %s30
      %s33 = sadd.s32 1, %s24
      %s34 = scalar_select %p31, %s33, %s24
      %p35 = scmp.ge.s32.totalorder %s34, 2
      %s36 = scalar_select %p35, 0, %s34
      %s37 = sadd.s32 %s24, %s25
      %s38 = sadd.s32 %s36, %s32
      %s39 = ssub.s32 %s37, %s38
      %p40 = scmp.eq.s32.totalorder %s39, 0
      %s42 = sadd.s32 %s41, 1
      %s43 = scalar_select %p40, %s41, %s42
      %p46 = pneg %p40
      %p47 = scmp.eq.s32.totalorder %s17, 1
      %p48 = por %p46, %p47
      %p49 = scmp.ne.s32.totalorder %s41, %s44
      %p50 = scmp.eq.s32.totalorder %s17, 0
      %p51 = por %p49, %p50
      %p52 = scmp.ne.s32.totalorder %s41, %s44
      %p53 = scmp.eq.s32.totalorder %s22, 1
      %p54 = por %p52, %p53
      %p55 = scmp.ne.s32.totalorder %s44, %s45
      %p56 = scmp.eq.s32.totalorder %s22, 0
      %p57 = por %p55, %p56
      %p58 = scmp.ne.s32.totalorder %s44, %s45
      %p59 = scmp.eq.s32.totalorder %s23, 1
      %p60 = por %p58, %p59
      %p62 = scmp.ne.s32.totalorder %s45, %s61
      %p63 = scmp.eq.s32.totalorder %s23, 0
      %p64 = por %p62, %p63
      %s66 = sadd.s32 %s65, 1
      %p69 = scmp.eq.s32.totalorder %s17, 1
      %p70 = scmp.ne.s32.totalorder %s65, %s67
      %p71 = scmp.eq.s32.totalorder %s17, 0
      %p72 = por %p70, %p71
      %p73 = scmp.ne.s32.totalorder %s65, %s67
      %p74 = scmp.eq.s32.totalorder %s22, 1
      %p75 = por %p73, %p74
      %p76 = scmp.ne.s32.totalorder %s67, %s68
      %p77 = scmp.eq.s32.totalorder %s22, 0
      %p78 = por %p76, %p77
      %p79 = scmp.ne.s32.totalorder %s67, %s68
      %p80 = scmp.eq.s32.totalorder %s23, 1
      %p81 = por %p79, %p80
      %p83 = scmp.ne.s32.totalorder %s68, %s82
      %p84 = scmp.eq.s32.totalorder %s23, 0
      %p85 = por %p83, %p84
      %s87 = sadd.s32 %s86, 1
      %p90 = scmp.eq.s32.totalorder %s17, 1
      %p91 = scmp.ne.s32.totalorder %s86, %s88
      %p92 = scmp.eq.s32.totalorder %s17, 0
      %p93 = por %p91, %p92
      %p94 = scmp.ne.s32.totalorder %s86, %s88
      %p95 = scmp.eq.s32.totalorder %s22, 1
      %p96 = por %p94, %p95
      %p97 = scmp.ne.s32.totalorder %s88, %s89
      %p98 = scmp.eq.s32.totalorder %s22, 0
      %p99 = por %p97, %p98
      %p100 = scmp.ne.s32.totalorder %s88, %s89
      %p101 = scmp.eq.s32.totalorder %s23, 1
      %p102 = por %p100, %p101
      %p104 = scmp.ne.s32.totalorder %s89, %s103
      %p105 = scmp.eq.s32.totalorder %s23, 0
      %p106 = por %p104, %p105
      %s107 = ssub.s32 %s24, %s36
      %p108 = scmp.eq.s32.totalorder %s107, 0
      %s110 = sadd.s32 %s109, 1
      %s111 = scalar_select %p108, %s109, %s110
      %p114 = pneg %p108
      %p115 = scmp.eq.s32.totalorder %s17, 1
      %p116 = por %p114, %p115
      %p117 = scmp.ne.s32.totalorder %s109, %s112
      %p118 = scmp.eq.s32.totalorder %s17, 0
      %p119 = por %p117, %p118
      %p120 = scmp.ne.s32.totalorder %s109, %s112
      %p121 = scmp.eq.s32.totalorder %s22, 1
      %p122 = por %p120, %p121
      %p123 = scmp.ne.s32.totalorder %s112, %s113
      %p124 = scmp.eq.s32.totalorder %s22, 0
      %p125 = por %p123, %p124
      %p126 = scmp.ne.s32.totalorder %s112, %s113
      %p127 = scmp.eq.s32.totalorder %s23, 1
      %p128 = por %p126, %p127
      %p130 = scmp.ne.s32.totalorder %s113, %s129
      %p131 = scmp.eq.s32.totalorder %s23, 0
      %p132 = por %p130, %p131
      %p133 = scmp.le.s32.totalorder 1, %s17
      %p134 = scmp.lt.s32.totalorder %s17, 3
      %p135 = pnand %p133, %p134
      %p136 = pneg %p135
      // Predicated region
      $region9: #{tpu_custom_call.1} parent=5 // pred_check
        _
      $region10: #{tpu_custom_call.1} parent=5 // pred_check_branch
        %138 = sbr.rel (%p135) target = $region12
      $region11: #{tpu_custom_call.1} parent=5 // pred_region
        %s139 = ssub.s32 %s17, 1
        // Predicated region
        $region13: #{tpu_custom_call.1} parent=11 // pred_check
          %p140 = pneg %p78
        $region14: #{tpu_custom_call.1} parent=11 // pred_check_branch
          %142 = sbr.rel (%p140) target = $region16
        $region15: #{tpu_custom_call.1} parent=11 // pred_region
          _
        $region16: #{tpu_custom_call.1} parent=11 // pred_fallthru
          _
        // Predicated region
        $region17: #{tpu_custom_call.1} parent=11 // pred_check
          %p143 = pneg %p99
        $region18: #{tpu_custom_call.1} parent=11 // pred_check_branch
          %145 = sbr.rel (%p143) target = $region20
        $region19: #{tpu_custom_call.1} parent=11 // pred_region
          _
        $region20: #{tpu_custom_call.1} parent=11 // pred_fallthru
          _
      $region12: #{tpu_custom_call.1} parent=5 // pred_fallthru
        _
      %p146 = scmp.lt.s32.totalorder %s17, 2
      // Predicated region
      $region21: #{tpu_custom_call.1} parent=5 // pred_check
        %p147 = pneg %p146
      $region22: #{tpu_custom_call.1} parent=5 // pred_check_branch
        %149 = sbr.rel (%p147) target = $region24
      $region23: #{tpu_custom_call.1} parent=5 // pred_region
        // Predicated region
        $region25: #{tpu_custom_call.1} parent=23 // pred_check
          %p150 = pneg %p51
        $region26: #{tpu_custom_call.1} parent=23 // pred_check_branch
          %152 = sbr.rel (%p150) target = $region28
        $region27: #{tpu_custom_call.1} parent=23 // pred_region
          %s153 = sand.u32 %s41, 1
          %s154 = scalar_lea.sflag [#allocation4], %s153
          %s155 = sand.u32 %s41, 1
          %s156 = smul.addr %s155, 128
          %s157 = scalar_lea.vmem [#allocation3], %s156
          %s158 = sadd.s32 %s24, %s25
          %s159 = smul.u32 16, %s158
          %s161 = ssub.s32 2048, 2048
          %162 = vsyncadd %s154, %s161
          %s163 = smul.addr %s159, 2
          %s164 = smul.addr %s163, 64
          %s165 = scalar_lea.hbm %s0, %s164
          %s166 = sshll.u32 %s157, 4
          %s167 = int_to_ptr.vmem [resolvable:$true] %s166
          %172 = dma.hbm_to_vmem [thread:$0]  %s165, 2048, %s167, %s154, 128, 128, 8
        $region28: #{tpu_custom_call.1} parent=23 // pred_fallthru
          _
      $region24: #{tpu_custom_call.1} parent=5 // pred_fallthru
        _
      %p173 = scmp.le.s32.totalorder 1, %s17
      %p174 = scmp.lt.s32.totalorder %s17, 3
      %p175 = pnand %p173, %p174
      %p176 = pneg %p175
      // Predicated region
      $region29: #{tpu_custom_call.1} parent=5 // pred_check
        _
      $region30: #{tpu_custom_call.1} parent=5 // pred_check_branch
        %178 = sbr.rel (%p175) target = $region32
      $region31: #{tpu_custom_call.1} parent=5 // pred_region
        %s179 = ssub.s32 %s17, 1
        %s180 = sand.u32 %s44, 1
        %s181 = scalar_lea.sflag [#allocation4], %s180
        %s182 = sand.u32 %s44, 1
        %s183 = smul.addr %s182, 128
        %s184 = scalar_lea.vmem [#allocation3], %s183
        // Predicated region
        $region33: #{tpu_custom_call.1} parent=31 // pred_check
          %p185 = pneg %p57
        $region34: #{tpu_custom_call.1} parent=31 // pred_check_branch
          %187 = sbr.rel (%p185) target = $region36
        $region35: #{tpu_custom_call.1} parent=31 // pred_region
          %188 = dma.done %s181, 2048
        $region36: #{tpu_custom_call.1} parent=31 // pred_fallthru
          _
        %s189 = sand.u32 %s44, 1
        %s190 = scalar_lea.sflag [#allocation4], %s189
        %s191 = sand.u32 %s44, 1
        %s192 = smul.addr %s191, 128
        %s193 = scalar_lea.vmem [#allocation3], %s192
        %p194 = pneg %p57
        %p195 = pneg %p54
        %p196 = pneg %p78
        %p197 = pneg %p75
        %p198 = pneg %p99
        %p199 = pneg %p96
        %p200 = pneg %p125
        %p201 = pneg %p122
        %s202 = sand.u32 %s112, 1
        %s203 = scalar_lea.sflag [#allocation5], %s202
        %s204 = sand.u32 %s112, 1
        %s205 = smul.addr %s204, 2
        %s206 = scalar_lea.vmem [#allocation6], %s205
        %s207 = sadd.s32 %s26, %s27
        %s208 = smul.u32 16, %s207
        %p210 = scmp.eq.s32.totalorder %s27, 0
        // Predicated region
        $region37: #{tpu_custom_call.1} parent=31 // pred_check
          %p211 = pneg %p210
        $region38: #{tpu_custom_call.1} parent=31 // pred_check_branch
          %213 = sbr.rel (%p211) target = $region40
        $region39: #{tpu_custom_call.1} parent=31 // pred_region
          %v214 = vlaneseq
          %vm215 = vcmp.ge.s32.totalorder %v214, 0
          %vm216 = vcmp.lt.s32.totalorder %v214, 256
          %vm217 = vmand %vm215, %vm216
          %218 = vst.msk [vmem:[%s206] sm:$0x3] %vm217, 0.0
        $region40: #{tpu_custom_call.1} parent=31 // pred_fallthru
          _
        %v219 = vld [vmem:[%s184] sm:$0xff]
        %v220 = vld [vmem:[%s184 + $0x8] sm:$0xff]
        %v221 = vld [vmem:[%s184 + $0x10] sm:$0xff]
        %v222 = vld [vmem:[%s184 + $0x18] sm:$0xff]
        %v223 = vld [vmem:[%s184 + $0x20] sm:$0xff]
        %v224 = vld [vmem:[%s184 + $0x28] sm:$0xff]
        %v225 = vld [vmem:[%s184 + $0x30] sm:$0xff]
        %v226 = vld [vmem:[%s184 + $0x38] sm:$0xff]
        %v227 = vld [vmem:[%s184 + $0x40] sm:$0xff]
        %v228 = vld [vmem:[%s184 + $0x48] sm:$0xff]
        %v229 = vld [vmem:[%s184 + $0x50] sm:$0xff]
        %v230 = vld [vmem:[%s184 + $0x58] sm:$0xff]
        %v231 = vld [vmem:[%s184 + $0x60] sm:$0xff]
        %v232 = vld [vmem:[%s184 + $0x68] sm:$0xff]
        %v233 = vld [vmem:[%s184 + $0x70] sm:$0xff]
        %v234 = vld [vmem:[%s184 + $0x78] sm:$0xff]
        %v235 = vld [vmem:[%s1] sm:$0xf]
        %v236 = vld [vmem:[%s1 + $0x4] sm:$0xf]
        %v237 = vld [vmem:[%s1 + $0x8] sm:$0xf]
        %v238 = vld [vmem:[%s1 + $0xc] sm:$0xf]
        %v239 = vld [vmem:[%s1 + $0x10] sm:$0xf]
        %v240 = vld [vmem:[%s1 + $0x14] sm:$0xf]
        %v241 = vld [vmem:[%s1 + $0x18] sm:$0xf]
        %v242 = vld [vmem:[%s1 + $0x1c] sm:$0xf]
        %v243 = vld [vmem:[%s1 + $0x20] sm:$0xf]
        %v244 = vld [vmem:[%s1 + $0x24] sm:$0xf]
        %v245 = vld [vmem:[%s1 + $0x28] sm:$0xf]
        %v246 = vld [vmem:[%s1 + $0x2c] sm:$0xf]
        %v247 = vld [vmem:[%s1 + $0x30] sm:$0xf]
        %v248 = vld [vmem:[%s1 + $0x34] sm:$0xf]
        %v249 = vld [vmem:[%s1 + $0x38] sm:$0xf]
        %v250 = vld [vmem:[%s1 + $0x3c] sm:$0xf]
        %v251 = vld [vmem:[%s1 + $0x40] sm:$0xf]
        %v252 = vld [vmem:[%s1 + $0x44] sm:$0xf]
        %v253 = vld [vmem:[%s1 + $0x48] sm:$0xf]
        %v254 = vld [vmem:[%s1 + $0x4c] sm:$0xf]
        %v255 = vld [vmem:[%s1 + $0x50] sm:$0xf]
        %v256 = vld [vmem:[%s1 + $0x54] sm:$0xf]
        %v257 = vld [vmem:[%s1 + $0x58] sm:$0xf]
        %v258 = vld [vmem:[%s1 + $0x5c] sm:$0xf]
        %v259 = vld [vmem:[%s1 + $0x60] sm:$0xf]
        %v260 = vld [vmem:[%s1 + $0x64] sm:$0xf]
        %v261 = vld [vmem:[%s1 + $0x68] sm:$0xf]
        %v262 = vld [vmem:[%s1 + $0x6c] sm:$0xf]
        %v263 = vld [vmem:[%s1 + $0x70] sm:$0xf]
        %v264 = vld [vmem:[%s1 + $0x74] sm:$0xf]
        %v265 = vld [vmem:[%s1 + $0x78] sm:$0xf]
        %v266 = vld [vmem:[%s1 + $0x7c] sm:$0xf]
        %v267 = vld [vmem:[#allocation2] sm:$0x1]
        %v269 = vlaneseq
        %v270 = vshrl.u32 %v269, 7
        %v271 = vsub.s32 0, %v270
        %v272 = vrot.slane %v267, %v271
        %v290 = vunpack.c.l.b16 %v219
        %v291 = vunpack.c.h.b16 %v219
        %v292 = vunpack.c.l.b16 %v220
        %v293 = vunpack.c.h.b16 %v220
        %v294 = vunpack.c.l.b16 %v221
        %v295 = vunpack.c.h.b16 %v221
        %v296 = vunpack.c.l.b16 %v222
        %v297 = vunpack.c.h.b16 %v222
        %v298 = vunpack.c.l.b16 %v223
        %v299 = vunpack.c.h.b16 %v223
        %v300 = vunpack.c.l.b16 %v224
        %v301 = vunpack.c.h.b16 %v224
        %v302 = vunpack.c.l.b16 %v225
        %v303 = vunpack.c.h.b16 %v225
        %v304 = vunpack.c.l.b16 %v226
        %v305 = vunpack.c.h.b16 %v226
        %v306 = vunpack.c.l.b16 %v227
        %v307 = vunpack.c.h.b16 %v227
        %v308 = vunpack.c.l.b16 %v228
        %v309 = vunpack.c.h.b16 %v228
        %v310 = vunpack.c.l.b16 %v229
        %v311 = vunpack.c.h.b16 %v229
        %v312 = vunpack.c.l.b16 %v230
        %v313 = vunpack.c.h.b16 %v230
        %v314 = vunpack.c.l.b16 %v231
        %v315 = vunpack.c.h.b16 %v231
        %v316 = vunpack.c.l.b16 %v232
        %v317 = vunpack.c.h.b16 %v232
        %v318 = vunpack.c.l.b16 %v233
        %v319 = vunpack.c.h.b16 %v233
        %v320 = vunpack.c.l.b16 %v234
        %v321 = vunpack.c.h.b16 %v234
        %v322 = vpack.c.b16 %v292, %v290
        %v323 = vpack.c.b16 %v293, %v291
        %v324 = vpack.c.b16 %v296, %v294
        %v325 = vpack.c.b16 %v297, %v295
        %v326 = vpack.c.b16 %v300, %v298
        %v327 = vpack.c.b16 %v301, %v299
        %v328 = vpack.c.b16 %v304, %v302
        %v329 = vpack.c.b16 %v305, %v303
        %v330 = vpack.c.b16 %v308, %v306
        %v331 = vpack.c.b16 %v309, %v307
        %v332 = vpack.c.b16 %v312, %v310
        %v333 = vpack.c.b16 %v313, %v311
        %v334 = vpack.c.b16 %v316, %v314
        %v335 = vpack.c.b16 %v317, %v315
        %v336 = vpack.c.b16 %v320, %v318
        %v337 = vpack.c.b16 %v321, %v319
        %v386 = vunpack.c.l.b16 %v235
        %v387 = vunpack.c.l.b16 %v236
        %v388 = vunpack.c.l.b16 %v237
        %v389 = vunpack.c.l.b16 %v238
        %v390 = vunpack.c.l.b16 %v239
        %v391 = vunpack.c.l.b16 %v240
        %v392 = vunpack.c.l.b16 %v241
        %v393 = vunpack.c.l.b16 %v242
        %v394 = vunpack.c.l.b16 %v243
        %v395 = vunpack.c.l.b16 %v244
        %v396 = vunpack.c.l.b16 %v245
        %v397 = vunpack.c.l.b16 %v246
        %v398 = vunpack.c.l.b16 %v247
        %v399 = vunpack.c.l.b16 %v248
        %v400 = vunpack.c.l.b16 %v249
        %v401 = vunpack.c.l.b16 %v250
        %v402 = vunpack.c.l.b16 %v251
        %v403 = vunpack.c.l.b16 %v252
        %v404 = vunpack.c.l.b16 %v253
        %v405 = vunpack.c.l.b16 %v254
        %v406 = vunpack.c.l.b16 %v255
        %v407 = vunpack.c.l.b16 %v256
        %v408 = vunpack.c.l.b16 %v257
        %v409 = vunpack.c.l.b16 %v258
        %v410 = vunpack.c.l.b16 %v259
        %v411 = vunpack.c.l.b16 %v260
        %v412 = vunpack.c.l.b16 %v261
        %v413 = vunpack.c.l.b16 %v262
        %v414 = vunpack.c.l.b16 %v263
        %v415 = vunpack.c.l.b16 %v264
        %v416 = vunpack.c.l.b16 %v265
        %v417 = vunpack.c.l.b16 %v266
        %v418 = vpack.c.b16 %v387, %v386
        %v419 = vpack.c.b16 %v389, %v388
        %v420 = vpack.c.b16 %v391, %v390
        %v421 = vpack.c.b16 %v393, %v392
        %v422 = vpack.c.b16 %v395, %v394
        %v423 = vpack.c.b16 %v397, %v396
        %v424 = vpack.c.b16 %v399, %v398
        %v425 = vpack.c.b16 %v401, %v400
        %v426 = vpack.c.b16 %v403, %v402
        %v427 = vpack.c.b16 %v405, %v404
        %v428 = vpack.c.b16 %v407, %v406
        %v429 = vpack.c.b16 %v409, %v408
        %v430 = vpack.c.b16 %v411, %v410
        %v431 = vpack.c.b16 %v413, %v412
        %v432 = vpack.c.b16 %v415, %v414
        %v433 = vpack.c.b16 %v417, %v416
        %450 = vmatprep.subr.bf16.mxu0 0
        %451 = vmatpush1.bf16.msra.mxu0 %v425
        %452 = vmatprep.subr.bf16.mxu0 0
        %453 = vmatpush1.bf16.msra.mxu0 %v424
        %454 = vmatprep.subr.bf16.mxu0 0
        %455 = vmatpush1.bf16.msra.mxu0 %v423
        %456 = vmatprep.subr.bf16.mxu0 0
        %457 = vmatpush1.bf16.msra.mxu0 %v422
        %458 = vmatprep.subr.bf16.mxu0 0
        %459 = vmatpush1.bf16.msra.mxu0 %v421
        %460 = vmatprep.subr.bf16.mxu0 0
        %461 = vmatpush1.bf16.msra.mxu0 %v420
        %462 = vmatprep.subr.bf16.mxu0 0
        %463 = vmatpush1.bf16.msra.mxu0 %v419
        %464 = vmatprep.subr.bf16.mxu0 0
        %465 = vmatpush1.bf16.msra.mxu0 %v418
        %466 = vmatprep.subr.bf16.mxu0 0
        %467 = vmatpush2.bf16.msra.mxu0 %v433
        %468 = vmatprep.subr.bf16.mxu0 0
        %469 = vmatpush2.bf16.msra.mxu0 %v432
        %470 = vmatprep.subr.bf16.mxu0 0
        %471 = vmatpush2.bf16.msra.mxu0 %v431
        %472 = vmatprep.subr.bf16.mxu0 0
        %473 = vmatpush2.bf16.msra.mxu0 %v430
        %474 = vmatprep.subr.bf16.mxu0 0
        %475 = vmatpush2.bf16.msra.mxu0 %v429
        %476 = vmatprep.subr.bf16.mxu0 0
        %477 = vmatpush2.bf16.msra.mxu0 %v428
        %478 = vmatprep.subr.bf16.mxu0 0
        %479 = vmatpush2.bf16.msra.mxu0 %v427
        %480 = vmatprep.subr.bf16.mxu0 0
        %481 = vmatpush2.bf16.msra.mxu0 %v426
        %482 = vmatprep.mubr.bf16.mxu0 %v323
        %483 = vmatmul.mubr.bf16.gmra.mxu0 %v322
        %v484 = vpop.f32.mrf.mxu0
        %v485 = vadd.f32 %v272, %v484
        %v486 = vpop.f32.mrf.mxu0
        %v487 = vpop.f32.mrf.mxu0
        %v488 = vadd.f32 %v272, %v487
        %v489 = vpop.f32.mrf.mxu0
        %490 = vmatprep.mubr.bf16.mxu0 %v325
        %491 = vmatmul.mubr.bf16.gmra.mxu0 %v324
        %v492 = vpop.f32.mrf.mxu0
        %v493 = vadd.f32 %v272, %v492
        %v494 = vpop.f32.mrf.mxu0
        %v495 = vpop.f32.mrf.mxu0
        %v496 = vadd.f32 %v272, %v495
        %v497 = vpop.f32.mrf.mxu0
        %498 = vmatprep.mubr.bf16.mxu0 %v327
        %499 = vmatmul.mubr.bf16.gmra.mxu0 %v326
        %v500 = vpop.f32.mrf.mxu0
        %v501 = vadd.f32 %v272, %v500
        %v502 = vpop.f32.mrf.mxu0
        %v503 = vpop.f32.mrf.mxu0
        %v504 = vadd.f32 %v272, %v503
        %v505 = vpop.f32.mrf.mxu0
        %506 = vmatprep.mubr.bf16.mxu0 %v329
        %507 = vmatmul.mubr.bf16.gmra.mxu0 %v328
        %v508 = vpop.f32.mrf.mxu0
        %v509 = vadd.f32 %v272, %v508
        %v510 = vpop.f32.mrf.mxu0
        %v511 = vpop.f32.mrf.mxu0
        %v512 = vadd.f32 %v272, %v511
        %v513 = vpop.f32.mrf.mxu0
        %514 = vmatprep.mubr.bf16.mxu0 %v331
        %515 = vmatmul.mubr.bf16.gmra.mxu0 %v330
        %v516 = vpop.f32.mrf.mxu0
        %v517 = vadd.f32 %v272, %v516
        %v518 = vpop.f32.mrf.mxu0
        %v519 = vpop.f32.mrf.mxu0
        %v520 = vadd.f32 %v272, %v519
        %v521 = vpop.f32.mrf.mxu0
        %522 = vmatprep.mubr.bf16.mxu0 %v333
        %523 = vmatmul.mubr.bf16.gmra.mxu0 %v332
        %v524 = vpop.f32.mrf.mxu0
        %v525 = vadd.f32 %v272, %v524
        %v526 = vpop.f32.mrf.mxu0
        %v527 = vpop.f32.mrf.mxu0
        %v528 = vadd.f32 %v272, %v527
        %v529 = vpop.f32.mrf.mxu0
        %530 = vmatprep.mubr.bf16.mxu0 %v335
        %531 = vmatmul.mubr.bf16.gmra.mxu0 %v334
        %v532 = vpop.f32.mrf.mxu0
        %v533 = vadd.f32 %v272, %v532
        %v534 = vpop.f32.mrf.mxu0
        %v535 = vpop.f32.mrf.mxu0
        %v536 = vadd.f32 %v272, %v535
        %v537 = vpop.f32.mrf.mxu0
        %538 = vmatprep.mubr.bf16.mxu0 %v337
        %539 = vmatmul.mubr.bf16.gmra.mxu0 %v336
        %v540 = vpop.f32.mrf.mxu0
        %v541 = vadd.f32 %v272, %v540
        %v542 = vpop.f32.mrf.mxu0
        %v543 = vpop.f32.mrf.mxu0
        %v544 = vadd.f32 %v272, %v543
        %v545 = vpop.f32.mrf.mxu0
        %546 = vdwg.mxu0
        %v547 = vpack.c.bf16 %v488, %v485
        %v548 = vpack.c.bf16 %v496, %v493
        %v549 = vpack.c.bf16 %v504, %v501
        %v550 = vpack.c.bf16 %v512, %v509
        %v551 = vpack.c.bf16 %v520, %v517
        %v552 = vpack.c.bf16 %v528, %v525
        %v553 = vpack.c.bf16 %v536, %v533
        %v554 = vpack.c.bf16 %v544, %v541
        %555 = vxpose.xlu0.c.b16.start [1/8] %v547, 128
        %556 = vxpose.xlu0.c.b16.cont [2/8] %v548, 128
        %557 = vxpose.xlu0.c.b16.cont [3/8] %v549, 128
        %558 = vxpose.xlu0.c.b16.cont [4/8] %v550, 128
        %559 = vxpose.xlu0.c.b16.cont [5/8] %v551, 128
        %560 = vxpose.xlu0.c.b16.cont [6/8] %v552, 128
        %561 = vxpose.xlu0.c.b16.cont [7/8] %v553, 128
        %562 = vxpose.xlu0.c.b16.end [8/8] %v554, 128
        %v563 = vpop.trf.xlu0
        %v564 = vpop.trf.xlu0
        %v565 = vpop.trf.xlu0
        %v566 = vpop.trf.xlu0
        %v567 = vpop.trf.xlu0
        %v568 = vpop.trf.xlu0
        %v569 = vpop.trf.xlu0
        %v570 = vpop.trf.xlu0
        %571 = vmatprep.subr.bf16.mxu0 %v337
        %572 = vmatpush1.bf16.msra.mxu0 %v336
        %573 = vmatprep.subr.bf16.mxu0 %v335
        %574 = vmatpush1.bf16.msra.mxu0 %v334
        %575 = vmatprep.subr.bf16.mxu0 %v333
        %576 = vmatpush1.bf16.msra.mxu0 %v332
        %577 = vmatprep.subr.bf16.mxu0 %v331
        %578 = vmatpush1.bf16.msra.mxu0 %v330
        %579 = vmatprep.subr.bf16.mxu0 %v329
        %580 = vmatpush1.bf16.msra.mxu0 %v328
        %581 = vmatprep.subr.bf16.mxu0 %v327
        %582 = vmatpush1.bf16.msra.mxu0 %v326
        %583 = vmatprep.subr.bf16.mxu0 %v325
        %584 = vmatpush1.bf16.msra.mxu0 %v324
        %585 = vmatprep.subr.bf16.mxu0 %v323
        %586 = vmatpush1.bf16.msra.mxu0 %v322
        %587 = vmatprep.subr.bf16.mxu0 0
        %588 = vmatpush2.bf16.msra.mxu0 0
        %589 = vmatprep.subr.bf16.mxu0 0
        %590 = vmatpush2.bf16.msra.mxu0 0
        %591 = vmatprep.subr.bf16.mxu0 0
        %592 = vmatpush2.bf16.msra.mxu0 0
        %593 = vmatprep.subr.bf16.mxu0 0
        %594 = vmatpush2.bf16.msra.mxu0 0
        %595 = vmatprep.subr.bf16.mxu0 0
        %596 = vmatpush2.bf16.msra.mxu0 0
        %597 = vmatprep.subr.bf16.mxu0 0
        %598 = vmatpush2.bf16.msra.mxu0 0
        %599 = vmatprep.subr.bf16.mxu0 0
        %600 = vmatpush2.bf16.msra.mxu0 0
        %601 = vmatprep.subr.bf16.mxu0 0
        %602 = vmatpush2.bf16.msra.mxu0 0
        %603 = vmatprep.mubr.bf16.mxu0 0
        %604 = vmatmul.mubr.bf16.gmra.mxu0 %v563
        %v605 = vpop.f32.mrf.mxu0
        %v606 = vadd.f32 0.0, %v605
        %v607 = vpop.f32.mrf.mxu0
        %v608 = vadd.f32 0.0, %v607
        %v609 = vpop.f32.mrf.mxu0
        %v610 = vpop.f32.mrf.mxu0
        %611 = vdwg.mxu0
        %v612 = vld [vmem:[%s206] sm:$0x3]
        %v615 = vcombine.low %v606, %v608
        %v617 = vunpack.c.l.s4 1966171168
        %v618 = vunpack.c.0.s8 %v617
        %v619 = vlaneseq
        %v620 = vshrl.u32 %v619, 7
        %v621 = vsub.s32 %v618, %v620
        %v622 = vrot.slane %v615, %v621
        %v624 = vunpack.c.l.s4 1966171168
        %v625 = vunpack.c.0.s8 %v624
        %v626 = vlaneseq
        %v627 = vshrl.u32 %v626, 7
        %v628 = vsub.s32 %v625, %v627
        %v629 = vrot.slane %v622, %v628
        %v631 = vadd.f32 %v612, %v629
        %v632 = vlaneseq
        %vm633 = vcmp.ge.s32.totalorder %v632, 0
        %vm634 = vcmp.lt.s32.totalorder %v632, 256
        %vm635 = vmand %vm633, %vm634
        %636 = vst.msk [vmem:[%s206] sm:$0x3] %vm635, %v631
        %s637 = sand.u32 %s112, 1
        %s638 = scalar_lea.sflag [#allocation5], %s637
        %s639 = sand.u32 %s112, 1
        %s640 = smul.addr %s639, 2
        %s641 = scalar_lea.vmem [#allocation6], %s640
        // Predicated region
        $region41: #{tpu_custom_call.1} parent=31 // pred_check
          %p642 = pneg %p122
        $region42: #{tpu_custom_call.1} parent=31 // pred_check_branch
          %644 = sbr.rel (%p642) target = $region44
        $region43: #{tpu_custom_call.1} parent=31 // pred_region
          %s646 = ssub.s32 32, 32
          %647 = vsyncadd %s638, %s646
          %s648 = smul.addr %s26, 2
          %s649 = smul.addr %s648, 16
          %s650 = scalar_lea.hbm %s3, %s649
          %s652 = sshll.u32 %s641, 4
          %s653 = int_to_ptr.vmem [resolvable:$true] %s652
          %655 = dma.vmem_to_hbm [thread:$0]  %s653, 32, %s650, %s638
        $region44: #{tpu_custom_call.1} parent=31 // pred_fallthru
          _
      $region32: #{tpu_custom_call.1} parent=5 // pred_fallthru
        _
      %p656 = scmp.le.s32.totalorder 2, %s17
      // Predicated region
      $region45: #{tpu_custom_call.1} parent=5 // pred_check
        %p657 = pneg %p656
      $region46: #{tpu_custom_call.1} parent=5 // pred_check_branch
        %659 = sbr.rel (%p657) target = $region48
      $region47: #{tpu_custom_call.1} parent=5 // pred_region
        %s660 = ssub.s32 %s17, 2
        // Predicated region
        $region49: #{tpu_custom_call.1} parent=47 // pred_check
          %p661 = pneg %p128
        $region50: #{tpu_custom_call.1} parent=47 // pred_check_branch
          %663 = sbr.rel (%p661) target = $region52
        $region51: #{tpu_custom_call.1} parent=47 // pred_region
          %s664 = sand.u32 %s113, 1
          %s665 = scalar_lea.sflag [#allocation5], %s664
          %s666 = sand.u32 %s113, 1
          %s667 = smul.addr %s666, 2
          %s668 = scalar_lea.vmem [#allocation6], %s667
          %669 = dma.done %s665, 32
        $region52: #{tpu_custom_call.1} parent=47 // pred_fallthru
          _
      $region48: #{tpu_custom_call.1} parent=5 // pred_fallthru
        _
    $region6: #{tpu_custom_call.1} parent=1 // loop_footer
      %s21 = sadd.s32 1, %s17
    $region7: #{tpu_custom_call.1} parent=1 // loop_footer_branch
      %16 = sbr.rel target = $region3
    $region8: #{tpu_custom_call.1} parent=1 // loop_exit
      _
    %670 = vsyncpa [#allocation4], 1
    %s671 = scalar_lea.sflag [#allocation4], 1
    %672 = vsyncpa %s671, 1
    %673 = vsyncpa [#allocation5], 1
    %s674 = scalar_lea.sflag [#allocation5], 1
    %675 = vsyncpa %s674, 1

</llo_original>
